<compile_context>
chip_gen: v7x
topology: tpu7x:2x2x1
jax: 0.10.0
libtpu: 0.0.40
codegen_flags: <defaults>
</compile_context>

<pallas_src>
import jax
import jax.numpy as jnp
from jax.experimental import pallas as pl
from jax.experimental.pallas import tpu as pltpu


def _round_up(x, m):
    return ((x + m - 1) // m) * m


def dnn_kernel(x_ref, w1, b1, w2, b2, w3, b3, w4, b4, w5, b5, o_ref):
    # All math in f32 regardless of x's streaming dtype (weights are f32 in
    # VMEM; only x's HBM stream and the output store use reduced precision).
    h = x_ref[...].astype(jnp.float32)
    h = jnp.maximum(jnp.dot(h, w1[...], preferred_element_type=jnp.float32) + b1[...], 0.0)
    h = jnp.maximum(jnp.dot(h, w2[...], preferred_element_type=jnp.float32) + b2[...], 0.0)
    h = jnp.maximum(jnp.dot(h, w3[...], preferred_element_type=jnp.float32) + b3[...], 0.0)
    h = jnp.maximum(jnp.dot(h, w4[...], preferred_element_type=jnp.float32) + b4[...], 0.0)
    h = jnp.dot(h, w5[...], preferred_element_type=jnp.float32) + b5[...]
    o_ref[...] = h.astype(o_ref.dtype)


def dnn_forward(x, params, *, block_m=2048, stream_dtype=None, out_dtype=None):
    """Fused MLP forward.

    x: (B, n_in); params: list of (W (in,out), b (1,out)).  Any B is accepted
    (the batch is padded to a multiple of block_m internally and the padding
    rows are sliced off).  `stream_dtype=jnp.bfloat16` halves x's HBM traffic
    (the dominant stream) on v6e/v7x while all math stays f32; `out_dtype`
    controls the dtype of the written output (defaults to x.dtype).
    """
    B, n_in = x.shape
    if stream_dtype is None:
        stream_dtype = x.dtype
    if out_dtype is None:
        out_dtype = x.dtype
    stream_dtype = jnp.dtype(stream_dtype)
    out_dtype = jnp.dtype(out_dtype)

    n_out = params[-1][0].shape[1]

    # Batch tile: multiple of 8 sublanes, no bigger than the (padded) batch,
    # and small enough that the grid has >= 2 steps whenever the batch allows
    # (keeps both v7x TensorCores busy on the 'parallel' axis).
    block_m = max(8, _round_up(int(block_m), 8))
    block_m = min(block_m, _round_up(B, 8))
    if B > 8:
        block_m = min(block_m, _round_up(pl.cdiv(B, 2), 8))
    B_padded = _round_up(B, block_m)

    x_p = x.astype(stream_dtype)
    if B_padded != B:
        x_p = jnp.pad(x_p, ((0, B_padded - B), (0, 0)))

    # Weights/biases stay f32 (tiny at these sizes; activations never hit HBM).
    prep = [(w.astype(jnp.float32), b.astype(jnp.float32)) for w, b in params]

    def full_spec(shape):
        # Whole parameter array as a single block, same block for every step.
        return pl.BlockSpec(shape, lambda i: (0, 0))

    in_specs = [pl.BlockSpec((block_m, n_in), lambda i: (i, 0))]
    flat_args = [x_p]
    for w, b in prep:
        in_specs.append(full_spec(w.shape))
        in_specs.append(full_spec(b.shape))
        flat_args.extend([w, b])

    # Advisory cost estimate so XLA can overlap this call with neighbours.
    flops = 2 * B_padded * sum(int(w.shape[0]) * int(w.shape[1]) for w, _ in prep)
    param_bytes = sum(w.size * w.dtype.itemsize + b.size * b.dtype.itemsize
                      for w, b in prep)
    bytes_accessed = (x_p.size * x_p.dtype.itemsize
                      + param_bytes
                      + B_padded * n_out * out_dtype.itemsize)
    cost = pl.CostEstimate(flops=flops, transcendentals=0,
                           bytes_accessed=bytes_accessed)

    # VMEM budget: double-buffered x + out blocks, double-buffered params, plus
    # slack for f32 intermediates.  Only raise the limit if we exceed the
    # conservative 16 MiB scoped default (v5e); cap at 64 MiB (v7x physical).
    max_hidden = max(int(w.shape[1]) for w, _ in prep)
    vmem_est = (2 * block_m * n_in * stream_dtype.itemsize
                + 2 * block_m * n_out * out_dtype.itemsize
                + 2 * param_bytes
                + 4 * block_m * max(max_hidden, n_in) * 4)
    vmem_limit = None
    if vmem_est > 16 * 1024 * 1024:
        vmem_limit = min(int(2 * vmem_est), 64 * 1024 * 1024)

    out = pl.pallas_call(
        dnn_kernel,
        out_shape=jax.ShapeDtypeStruct((B_padded, n_out), out_dtype),
        grid_spec=pltpu.PrefetchScalarGridSpec(
            num_scalar_prefetch=0,
            grid=(B_padded // block_m,),
            in_specs=in_specs,
            out_specs=pl.BlockSpec((block_m, n_out), lambda i: (i, 0)),
        ),
        compiler_params=pltpu.CompilerParams(
            dimension_semantics=("parallel",),
            vmem_limit_bytes=vmem_limit),
        cost_estimate=cost,
    )(*flat_args)

    return out[:B, :]


def init_params(key, n_in, n_out, hs):
    """Deterministic init mimicking nn.Linear's U(-1/sqrt(fan_in), 1/sqrt(fan_in))."""
    dims = [(n_in, hs), (hs, hs // 2), (hs // 2, hs // 4),
            (hs // 4, hs // 2), (hs // 2, n_out)]
    params = []
    for fan_in, fan_out in dims:
        key, kw, kb = jax.random.split(key, 3)
        bound = 1.0 / float(fan_in) ** 0.5
        w = jax.random.uniform(kw, (fan_in, fan_out), jnp.float32, -bound, bound)
        b = jax.random.uniform(kb, (1, fan_out), jnp.float32, -bound, bound)
        params.append((w, b))
    return params


def dnn_reference(x, params):
    h = x
    for i, (w, b) in enumerate(params):
        h = h @ w + b
        if i < len(params) - 1:
            h = jnp.maximum(h, 0.0)
    return h


if __name__ == "__main__":
    # Shapes consistent with the module: n_in=32, hs=32 -> hidden sizes
    # 32, 16, 8, 16; n_out=4.
    n_in, n_out, hs = 32, 4, 32

    key = jax.random.PRNGKey(0)
    key, kx = jax.random.split(key)
    params = init_params(key, n_in, n_out, hs)

    # 1) Small batch, float32 (exact semantics of the PyTorch module).
    x = jax.random.normal(kx, (16, n_in), jnp.float32)
    out = jax.block_until_ready(dnn_forward(x, params))
    ref = dnn_reference(x, params)
    assert out.shape == (16, n_out)
    assert out.dtype == jnp.float32
    assert jnp.allclose(out, ref, atol=1e-5, rtol=1e-5), "f32 mismatch vs reference"

    # 2) Batch not divisible by the tile: exercises batch padding plus a
    #    multi-step 'parallel' grid (>= 2 steps are guaranteed by the clamp).
    key, kx2 = jax.random.split(key)
    x2 = jax.random.normal(kx2, (300, n_in), jnp.float32)
    out2 = jax.block_until_ready(dnn_forward(x2, params))
    ref2 = dnn_reference(x2, params)
    assert out2.shape == (300, n_out)
    assert jnp.allclose(out2, ref2, atol=1e-5, rtol=1e-5), "padded-batch mismatch"

    # 3) bf16 streaming path (memory-bound win on v6e/v7x); all math stays f32,
    #    so only x's bf16 quantization contributes error.
    out3 = jax.block_until_ready(
        dnn_forward(x2, params, stream_dtype=jnp.bfloat16))
    assert out3.shape == (300, n_out)
    assert bool(jnp.all(jnp.isfinite(out3)))
    assert float(jnp.max(jnp.abs(out3 - ref2))) < 0.05, "bf16 streaming diverged"

    # 4) Reduced-precision output store (halves writeback bytes).
    out4 = jax.block_until_ready(
        dnn_forward(x2, params, stream_dtype=jnp.bfloat16,
                    out_dtype=jnp.bfloat16))
    assert out4.shape == (300, n_out)
    assert out4.dtype == jnp.bfloat16
    assert float(jnp.max(jnp.abs(out4.astype(jnp.float32) - ref2))) < 0.1

    print("KERNEL_OK")
</pallas_src>

<mosaic_0001>
module attributes {stable_mosaic.version = 11 : i64} {
  func.func @dnn_kernel(%arg0: i32, %arg1: memref<8x32xf32, #tpu.memory_space<vmem>>, %arg2: memref<32x32xf32, #tpu.memory_space<vmem>>, %arg3: memref<1x32xf32, #tpu.memory_space<vmem>>, %arg4: memref<32x16xf32, #tpu.memory_space<vmem>>, %arg5: memref<1x16xf32, #tpu.memory_space<vmem>>, %arg6: memref<16x8xf32, #tpu.memory_space<vmem>>, %arg7: memref<1x8xf32, #tpu.memory_space<vmem>>, %arg8: memref<8x16xf32, #tpu.memory_space<vmem>>, %arg9: memref<1x16xf32, #tpu.memory_space<vmem>>, %arg10: memref<16x4xf32, #tpu.memory_space<vmem>>, %arg11: memref<1x4xf32, #tpu.memory_space<vmem>>, %arg12: memref<8x4xf32, #tpu.memory_space<vmem>>) attributes {dimension_semantics = [#tpu.dimension_semantics<parallel>], iteration_bounds = array<i64: 2>, scalar_prefetch = 0 : i64, scratch_operands = 0 : i64, tpu.core_type = #tpu.core_type<tc>, window_params = [{transform_indices = @transform_0, window_bounds = array<i64: 8, 32>}, {pipeline_mode = #tpu.pipeline_mode<synchronous>, transform_indices = @transform_1, window_bounds = array<i64: 32, 32>}, {pipeline_mode = #tpu.pipeline_mode<synchronous>, transform_indices = @transform_2, window_bounds = array<i64: 1, 32>}, {pipeline_mode = #tpu.pipeline_mode<synchronous>, transform_indices = @transform_3, window_bounds = array<i64: 32, 16>}, {pipeline_mode = #tpu.pipeline_mode<synchronous>, transform_indices = @transform_4, window_bounds = array<i64: 1, 16>}, {pipeline_mode = #tpu.pipeline_mode<synchronous>, transform_indices = @transform_5, window_bounds = array<i64: 16, 8>}, {pipeline_mode = #tpu.pipeline_mode<synchronous>, transform_indices = @transform_6, window_bounds = array<i64: 1, 8>}, {pipeline_mode = #tpu.pipeline_mode<synchronous>, transform_indices = @transform_7, window_bounds = array<i64: 8, 16>}, {pipeline_mode = #tpu.pipeline_mode<synchronous>, transform_indices = @transform_8, window_bounds = array<i64: 1, 16>}, {pipeline_mode = #tpu.pipeline_mode<synchronous>, transform_indices = @transform_9, window_bounds = array<i64: 16, 4>}, {pipeline_mode = #tpu.pipeline_mode<synchronous>, transform_indices = @transform_10, window_bounds = array<i64: 1, 4>}, {transform_indices = @transform_11, window_bounds = array<i64: 8, 4>}]} {
    %c0 = arith.constant 0 : index
    %c0_0 = arith.constant 0 : index
    %0 = vector.load %arg1[%c0, %c0_0] : memref<8x32xf32, #tpu.memory_space<vmem>>, vector<8x32xf32>
    %c0_1 = arith.constant 0 : index
    %c0_2 = arith.constant 0 : index
    %1 = vector.load %arg2[%c0_1, %c0_2] : memref<32x32xf32, #tpu.memory_space<vmem>>, vector<32x32xf32>
    %cst = arith.constant dense<0.000000e+00> : vector<8x32xf32>
    %2 = tpu.matmul %0, %1, %cst {dimension_numbers = #tpu.dot_dimension_numbers<[1], [0], [0], [1], [0, 0, 1, 1], [], []>} : vector<8x32xf32>, vector<32x32xf32>, vector<8x32xf32> -> vector<8x32xf32>
    %c0_3 = arith.constant 0 : index
    %c0_4 = arith.constant 0 : index
    %3 = vector.load %arg3[%c0_3, %c0_4] : memref<1x32xf32, #tpu.memory_space<vmem>>, vector<1x32xf32>
    %4 = vector.broadcast %3 : vector<1x32xf32> to vector<8x32xf32>
    %5 = arith.addf %2, %4 : vector<8x32xf32>
    %cst_5 = arith.constant 0.000000e+00 : f32
    %6 = vector.broadcast %cst_5 : f32 to vector<8x32xf32>
    %7 = arith.maximumf %5, %6 : vector<8x32xf32>
    %c0_6 = arith.constant 0 : index
    %c0_7 = arith.constant 0 : index
    %8 = vector.load %arg4[%c0_6, %c0_7] : memref<32x16xf32, #tpu.memory_space<vmem>>, vector<32x16xf32>
    %cst_8 = arith.constant dense<0.000000e+00> : vector<8x16xf32>
    %9 = tpu.matmul %7, %8, %cst_8 {dimension_numbers = #tpu.dot_dimension_numbers<[1], [0], [0], [1], [0, 0, 1, 1], [], []>} : vector<8x32xf32>, vector<32x16xf32>, vector<8x16xf32> -> vector<8x16xf32>
    %c0_9 = arith.constant 0 : index
    %c0_10 = arith.constant 0 : index
    %10 = vector.load %arg5[%c0_9, %c0_10] : memref<1x16xf32, #tpu.memory_space<vmem>>, vector<1x16xf32>
    %11 = vector.broadcast %10 : vector<1x16xf32> to vector<8x16xf32>
    %12 = arith.addf %9, %11 : vector<8x16xf32>
    %cst_11 = arith.constant 0.000000e+00 : f32
    %13 = vector.broadcast %cst_11 : f32 to vector<8x16xf32>
    %14 = arith.maximumf %12, %13 : vector<8x16xf32>
    %c0_12 = arith.constant 0 : index
    %c0_13 = arith.constant 0 : index
    %15 = vector.load %arg6[%c0_12, %c0_13] : memref<16x8xf32, #tpu.memory_space<vmem>>, vector<16x8xf32>
    %cst_14 = arith.constant dense<0.000000e+00> : vector<8x8xf32>
    %16 = tpu.matmul %14, %15, %cst_14 {dimension_numbers = #tpu.dot_dimension_numbers<[1], [0], [0], [1], [0, 0, 1, 1], [], []>} : vector<8x16xf32>, vector<16x8xf32>, vector<8x8xf32> -> vector<8x8xf32>
    %c0_15 = arith.constant 0 : index
    %c0_16 = arith.constant 0 : index
    %17 = vector.load %arg7[%c0_15, %c0_16] : memref<1x8xf32, #tpu.memory_space<vmem>>, vector<1x8xf32>
    %18 = vector.broadcast %17 : vector<1x8xf32> to vector<8x8xf32>
    %19 = arith.addf %16, %18 : vector<8x8xf32>
    %cst_17 = arith.constant 0.000000e+00 : f32
    %20 = vector.broadcast %cst_17 : f32 to vector<8x8xf32>
    %21 = arith.maximumf %19, %20 : vector<8x8xf32>
    %c0_18 = arith.constant 0 : index
    %c0_19 = arith.constant 0 : index
    %22 = vector.load %arg8[%c0_18, %c0_19] : memref<8x16xf32, #tpu.memory_space<vmem>>, vector<8x16xf32>
    %cst_20 = arith.constant dense<0.000000e+00> : vector<8x16xf32>
    %23 = tpu.matmul %21, %22, %cst_20 {dimension_numbers = #tpu.dot_dimension_numbers<[1], [0], [0], [1], [0, 0, 1, 1], [], []>} : vector<8x8xf32>, vector<8x16xf32>, vector<8x16xf32> -> vector<8x16xf32>
    %c0_21 = arith.constant 0 : index
    %c0_22 = arith.constant 0 : index
    %24 = vector.load %arg9[%c0_21, %c0_22] : memref<1x16xf32, #tpu.memory_space<vmem>>, vector<1x16xf32>
    %25 = vector.broadcast %24 : vector<1x16xf32> to vector<8x16xf32>
    %26 = arith.addf %23, %25 : vector<8x16xf32>
    %cst_23 = arith.constant 0.000000e+00 : f32
    %27 = vector.broadcast %cst_23 : f32 to vector<8x16xf32>
    %28 = arith.maximumf %26, %27 : vector<8x16xf32>
    %c0_24 = arith.constant 0 : index
    %c0_25 = arith.constant 0 : index
    %29 = vector.load %arg10[%c0_24, %c0_25] : memref<16x4xf32, #tpu.memory_space<vmem>>, vector<16x4xf32>
    %cst_26 = arith.constant dense<0.000000e+00> : vector<8x4xf32>
    %30 = tpu.matmul %28, %29, %cst_26 {dimension_numbers = #tpu.dot_dimension_numbers<[1], [0], [0], [1], [0, 0, 1, 1], [], []>} : vector<8x16xf32>, vector<16x4xf32>, vector<8x4xf32> -> vector<8x4xf32>
    %c0_27 = arith.constant 0 : index
    %c0_28 = arith.constant 0 : index
    %31 = vector.load %arg11[%c0_27, %c0_28] : memref<1x4xf32, #tpu.memory_space<vmem>>, vector<1x4xf32>
    %32 = vector.broadcast %31 : vector<1x4xf32> to vector<8x4xf32>
    %33 = arith.addf %30, %32 : vector<8x4xf32>
    %c0_29 = arith.constant 0 : index
    %c0_30 = arith.constant 0 : index
    %34 = vector.load %arg12[%c0_29, %c0_30] : memref<8x4xf32, #tpu.memory_space<vmem>>, vector<8x4xf32>
    tpu.vector_store %arg12[%c0_29, %c0_30], %33 {strides = array<i32>} : memref<8x4xf32, #tpu.memory_space<vmem>>, vector<8x4xf32>,
    return
  }
  func.func @transform_0(%arg0: i32) -> (i32, i32) {
    %c0_i32 = arith.constant 0 : i32
    %c0_i32_0 = arith.constant 0 : i32
    return %arg0, %c0_i32 : i32, i32
  }
  func.func @transform_1(%arg0: i32) -> (i32, i32) {
    %c0_i32 = arith.constant 0 : i32
    %c0_i32_0 = arith.constant 0 : i32
    %c0_i32_1 = arith.constant 0 : i32
    return %c0_i32, %c0_i32_0 : i32, i32
  }
  func.func @transform_2(%arg0: i32) -> (i32, i32) {
    %c0_i32 = arith.constant 0 : i32
    %c0_i32_0 = arith.constant 0 : i32
    %c0_i32_1 = arith.constant 0 : i32
    return %c0_i32, %c0_i32_0 : i32, i32
  }
  func.func @transform_3(%arg0: i32) -> (i32, i32) {
    %c0_i32 = arith.constant 0 : i32
    %c0_i32_0 = arith.constant 0 : i32
    %c0_i32_1 = arith.constant 0 : i32
    return %c0_i32, %c0_i32_0 : i32, i32
  }
  func.func @transform_4(%arg0: i32) -> (i32, i32) {
    %c0_i32 = arith.constant 0 : i32
    %c0_i32_0 = arith.constant 0 : i32
    %c0_i32_1 = arith.constant 0 : i32
    return %c0_i32, %c0_i32_0 : i32, i32
  }
  func.func @transform_5(%arg0: i32) -> (i32, i32) {
    %c0_i32 = arith.constant 0 : i32
    %c0_i32_0 = arith.constant 0 : i32
    %c0_i32_1 = arith.constant 0 : i32
    return %c0_i32, %c0_i32_0 : i32, i32
  }
  func.func @transform_6(%arg0: i32) -> (i32, i32) {
    %c0_i32 = arith.constant 0 : i32
    %c0_i32_0 = arith.constant 0 : i32
    %c0_i32_1 = arith.constant 0 : i32
    return %c0_i32, %c0_i32_0 : i32, i32
  }
  func.func @transform_7(%arg0: i32) -> (i32, i32) {
    %c0_i32 = arith.constant 0 : i32
    %c0_i32_0 = arith.constant 0 : i32
    %c0_i32_1 = arith.constant 0 : i32
    return %c0_i32, %c0_i32_0 : i32, i32
  }
  func.func @transform_8(%arg0: i32) -> (i32, i32) {
    %c0_i32 = arith.constant 0 : i32
    %c0_i32_0 = arith.constant 0 : i32
    %c0_i32_1 = arith.constant 0 : i32
    return %c0_i32, %c0_i32_0 : i32, i32
  }
  func.func @transform_9(%arg0: i32) -> (i32, i32) {
    %c0_i32 = arith.constant 0 : i32
    %c0_i32_0 = arith.constant 0 : i32
    %c0_i32_1 = arith.constant 0 : i32
    return %c0_i32, %c0_i32_0 : i32, i32
  }
  func.func @transform_10(%arg0: i32) -> (i32, i32) {
    %c0_i32 = arith.constant 0 : i32
    %c0_i32_0 = arith.constant 0 : i32
    %c0_i32_1 = arith.constant 0 : i32
    return %c0_i32, %c0_i32_0 : i32, i32
  }
  func.func @transform_11(%arg0: i32) -> (i32, i32) {
    %c0_i32 = arith.constant 0 : i32
    %c0_i32_0 = arith.constant 0 : i32
    return %arg0, %c0_i32 : i32, i32
  }
}

</mosaic_0001>

<llo_original>
// kernel: tpu_custom_call.1
$region0: #{tpu_custom_call.1}
  #allocation0 [shape = 'u32[]', space=smem, size = 0x4, offset = 0x4, fixed_abs, tag = 'smem constant byte address 0x4 - core index']
  #allocation1 [shape = 'u32[144,128]{1,0:T(1,128)}', space=vmem, size = 0x12000, scoped, tag = 'internal scratch']
  %s0 = inlined_call_operand.vmem [shape: f32[16,32], index: 0, kind: input, shape index: {}]
  %s1 = inlined_call_operand.vmem [shape: f32[32,32], index: 1, kind: input, shape index: {}]
  %s2 = inlined_call_operand.vmem [shape: f32[1,32], index: 2, kind: input, shape index: {}]
  %s3 = inlined_call_operand.vmem [shape: f32[32,16], index: 3, kind: input, shape index: {}]
  %s4 = inlined_call_operand.vmem [shape: f32[1,16], index: 4, kind: input, shape index: {}]
  %s5 = inlined_call_operand.vmem [shape: f32[16,8], index: 5, kind: input, shape index: {}]
  %s6 = inlined_call_operand.vmem [shape: f32[1,8], index: 6, kind: input, shape index: {}]
  %s7 = inlined_call_operand.vmem [shape: f32[8,16], index: 7, kind: input, shape index: {}]
  %s8 = inlined_call_operand.vmem [shape: f32[1,16], index: 8, kind: input, shape index: {}]
  %s9 = inlined_call_operand.vmem [shape: f32[16,4], index: 9, kind: input, shape index: {}]
  %s10 = inlined_call_operand.vmem [shape: f32[1,4], index: 10, kind: input, shape index: {}]
  %s11 = inlined_call_operand.vmem [shape: f32[16,4], index: 11, kind: output, shape index: {}]
  %s12 = sld [smem:[#allocation0]]
  $region77: #{tpu_custom_call.1} parent=0
    _
  %s14 = ssub.s32 1, %s12
  %s15 = scalar_select 0, %s14, %s12
  loop: start=0, step=1, limit=4
  $region2: #{tpu_custom_call.1} parent=0 // loop_pre_header
    _
  $region3: #{tpu_custom_call.1} parent=0 // loop_header
    %s17 = sphi 0, %s21
    %p18 = scmp.ge.s32.totalorder %s17, 4
    %s27 = sphi 0, %s29
    %s30 = sphi 0, %s27
    %s31 = sphi 0, %s30
    %s47 = sphi 0, %s31
    %s51 = sphi 0, %s51
    %s53 = sphi 0, %s51
    %s54 = sphi 0, %s53
    %s68 = sphi 0, %s54
    %s72 = sphi 0, %s72
    %s74 = sphi 0, %s72
    %s75 = sphi 0, %s74
    %s89 = sphi 0, %s75
    %s93 = sphi 0, %s93
    %s95 = sphi 0, %s93
    %s96 = sphi 0, %s95
    %s110 = sphi 0, %s96
    %s114 = sphi 0, %s114
    %s116 = sphi 0, %s114
    %s117 = sphi 0, %s116
    %s131 = sphi 0, %s117
    %s135 = sphi 0, %s135
    %s137 = sphi 0, %s135
    %s138 = sphi 0, %s137
    %s152 = sphi 0, %s138
    %s156 = sphi 0, %s156
    %s158 = sphi 0, %s156
    %s159 = sphi 0, %s158
    %s173 = sphi 0, %s159
    %s177 = sphi 0, %s177
    %s179 = sphi 0, %s177
    %s180 = sphi 0, %s179
    %s194 = sphi 0, %s180
    %s198 = sphi 0, %s198
    %s200 = sphi 0, %s198
    %s201 = sphi 0, %s200
    %s215 = sphi 0, %s201
    %s219 = sphi 0, %s219
    %s221 = sphi 0, %s219
    %s222 = sphi 0, %s221
    %s236 = sphi 0, %s222
    %s240 = sphi 0, %s240
    %s242 = sphi 0, %s240
    %s243 = sphi 0, %s242
    %s257 = sphi 0, %s243
    %s263 = sphi 0, %s265
    %s266 = sphi 0, %s263
    %s267 = sphi 0, %s266
    %s283 = sphi 0, %s267
  $region4: #{tpu_custom_call.1} parent=0 // loop_header_branch
    %20 = sbr.rel (%p18) target = $region8
  $region5: #{tpu_custom_call.1} parent=0 // loop_body
    %s22 = ssub.s32 %s17, 1
    %s23 = ssub.s32 %s17, 2
    %s24 = sadd.s32 %s17, 1
    %s25 = ssub.s32 %s17, %s24
    %p26 = scmp.eq.s32.totalorder %s25, 0
    %s28 = sadd.s32 %s27, 1
    %s29 = scalar_select %p26, %s27, %s28
    %p32 = pneg %p26
    %p33 = scmp.eq.s32.totalorder %s17, 1
    %p34 = por %p32, %p33
    %p35 = scmp.ne.s32.totalorder %s27, %s30
    %p36 = scmp.eq.s32.totalorder %s17, 0
    %p37 = por %p35, %p36
    %p38 = scmp.ne.s32.totalorder %s27, %s30
    %p39 = scmp.eq.s32.totalorder %s22, 1
    %p40 = por %p38, %p39
    %p41 = scmp.ne.s32.totalorder %s30, %s31
    %p42 = scmp.eq.s32.totalorder %s22, 0
    %p43 = por %p41, %p42
    %p44 = scmp.ne.s32.totalorder %s30, %s31
    %p45 = scmp.eq.s32.totalorder %s23, 1
    %p46 = por %p44, %p45
    %p48 = scmp.ne.s32.totalorder %s31, %s47
    %p49 = scmp.eq.s32.totalorder %s23, 0
    %p50 = por %p48, %p49
    %s52 = sadd.s32 %s51, 1
    %p55 = scmp.eq.s32.totalorder %s17, 1
    %p56 = scmp.ne.s32.totalorder %s51, %s53
    %p57 = scmp.eq.s32.totalorder %s17, 0
    %p58 = por %p56, %p57
    %p59 = scmp.ne.s32.totalorder %s51, %s53
    %p60 = scmp.eq.s32.totalorder %s22, 1
    %p61 = por %p59, %p60
    %p62 = scmp.ne.s32.totalorder %s53, %s54
    %p63 = scmp.eq.s32.totalorder %s22, 0
    %p64 = por %p62, %p63
    %p65 = scmp.ne.s32.totalorder %s53, %s54
    %p66 = scmp.eq.s32.totalorder %s23, 1
    %p67 = por %p65, %p66
    %p69 = scmp.ne.s32.totalorder %s54, %s68
    %p70 = scmp.eq.s32.totalorder %s23, 0
    %p71 = por %p69, %p70
    %s73 = sadd.s32 %s72, 1
    %p76 = scmp.eq.s32.totalorder %s17, 1
    %p77 = scmp.ne.s32.totalorder %s72, %s74
    %p78 = scmp.eq.s32.totalorder %s17, 0
    %p79 = por %p77, %p78
    %p80 = scmp.ne.s32.totalorder %s72, %s74
    %p81 = scmp.eq.s32.totalorder %s22, 1
    %p82 = por %p80, %p81
    %p83 = scmp.ne.s32.totalorder %s74, %s75
    %p84 = scmp.eq.s32.totalorder %s22, 0
    %p85 = por %p83, %p84
    %p86 = scmp.ne.s32.totalorder %s74, %s75
    %p87 = scmp.eq.s32.totalorder %s23, 1
    %p88 = por %p86, %p87
    %p90 = scmp.ne.s32.totalorder %s75, %s89
    %p91 = scmp.eq.s32.totalorder %s23, 0
    %p92 = por %p90, %p91
    %s94 = sadd.s32 %s93, 1
    %p97 = scmp.eq.s32.totalorder %s17, 1
    %p98 = scmp.ne.s32.totalorder %s93, %s95
    %p99 = scmp.eq.s32.totalorder %s17, 0
    %p100 = por %p98, %p99
    %p101 = scmp.ne.s32.totalorder %s93, %s95
    %p102 = scmp.eq.s32.totalorder %s22, 1
    %p103 = por %p101, %p102
    %p104 = scmp.ne.s32.totalorder %s95, %s96
    %p105 = scmp.eq.s32.totalorder %s22, 0
    %p106 = por %p104, %p105
    %p107 = scmp.ne.s32.totalorder %s95, %s96
    %p108 = scmp.eq.s32.totalorder %s23, 1
    %p109 = por %p107, %p108
    %p111 = scmp.ne.s32.totalorder %s96, %s110
    %p112 = scmp.eq.s32.totalorder %s23, 0
    %p113 = por %p111, %p112
    %s115 = sadd.s32 %s114, 1
    %p118 = scmp.eq.s32.totalorder %s17, 1
    %p119 = scmp.ne.s32.totalorder %s114, %s116
    %p120 = scmp.eq.s32.totalorder %s17, 0
    %p121 = por %p119, %p120
    %p122 = scmp.ne.s32.totalorder %s114, %s116
    %p123 = scmp.eq.s32.totalorder %s22, 1
    %p124 = por %p122, %p123
    %p125 = scmp.ne.s32.totalorder %s116, %s117
    %p126 = scmp.eq.s32.totalorder %s22, 0
    %p127 = por %p125, %p126
    %p128 = scmp.ne.s32.totalorder %s116, %s117
    %p129 = scmp.eq.s32.totalorder %s23, 1
    %p130 = por %p128, %p129
    %p132 = scmp.ne.s32.totalorder %s117, %s131
    %p133 = scmp.eq.s32.totalorder %s23, 0
    %p134 = por %p132, %p133
    %s136 = sadd.s32 %s135, 1
    %p139 = scmp.eq.s32.totalorder %s17, 1
    %p140 = scmp.ne.s32.totalorder %s135, %s137
    %p141 = scmp.eq.s32.totalorder %s17, 0
    %p142 = por %p140, %p141
    %p143 = scmp.ne.s32.totalorder %s135, %s137
    %p144 = scmp.eq.s32.totalorder %s22, 1
    %p145 = por %p143, %p144
    %p146 = scmp.ne.s32.totalorder %s137, %s138
    %p147 = scmp.eq.s32.totalorder %s22, 0
    %p148 = por %p146, %p147
    %p149 = scmp.ne.s32.totalorder %s137, %s138
    %p150 = scmp.eq.s32.totalorder %s23, 1
    %p151 = por %p149, %p150
    %p153 = scmp.ne.s32.totalorder %s138, %s152
    %p154 = scmp.eq.s32.totalorder %s23, 0
    %p155 = por %p153, %p154
    %s157 = sadd.s32 %s156, 1
    %p160 = scmp.eq.s32.totalorder %s17, 1
    %p161 = scmp.ne.s32.totalorder %s156, %s158
    %p162 = scmp.eq.s32.totalorder %s17, 0
    %p163 = por %p161, %p162
    %p164 = scmp.ne.s32.totalorder %s156, %s158
    %p165 = scmp.eq.s32.totalorder %s22, 1
    %p166 = por %p164, %p165
    %p167 = scmp.ne.s32.totalorder %s158, %s159
    %p168 = scmp.eq.s32.totalorder %s22, 0
    %p169 = por %p167, %p168
    %p170 = scmp.ne.s32.totalorder %s158, %s159
    %p171 = scmp.eq.s32.totalorder %s23, 1
    %p172 = por %p170, %p171
    %p174 = scmp.ne.s32.totalorder %s159, %s173
    %p175 = scmp.eq.s32.totalorder %s23, 0
    %p176 = por %p174, %p175
    %s178 = sadd.s32 %s177, 1
    %p181 = scmp.eq.s32.totalorder %s17, 1
    %p182 = scmp.ne.s32.totalorder %s177, %s179
    %p183 = scmp.eq.s32.totalorder %s17, 0
    %p184 = por %p182, %p183
    %p185 = scmp.ne.s32.totalorder %s177, %s179
    %p186 = scmp.eq.s32.totalorder %s22, 1
    %p187 = por %p185, %p186
    %p188 = scmp.ne.s32.totalorder %s179, %s180
    %p189 = scmp.eq.s32.totalorder %s22, 0
    %p190 = por %p188, %p189
    %p191 = scmp.ne.s32.totalorder %s179, %s180
    %p192 = scmp.eq.s32.totalorder %s23, 1
    %p193 = por %p191, %p192
    %p195 = scmp.ne.s32.totalorder %s180, %s194
    %p196 = scmp.eq.s32.totalorder %s23, 0
    %p197 = por %p195, %p196
    %s199 = sadd.s32 %s198, 1
    %p202 = scmp.eq.s32.totalorder %s17, 1
    %p203 = scmp.ne.s32.totalorder %s198, %s200
    %p204 = scmp.eq.s32.totalorder %s17, 0
    %p205 = por %p203, %p204
    %p206 = scmp.ne.s32.totalorder %s198, %s200
    %p207 = scmp.eq.s32.totalorder %s22, 1
    %p208 = por %p206, %p207
    %p209 = scmp.ne.s32.totalorder %s200, %s201
    %p210 = scmp.eq.s32.totalorder %s22, 0
    %p211 = por %p209, %p210
    %p212 = scmp.ne.s32.totalorder %s200, %s201
    %p213 = scmp.eq.s32.totalorder %s23, 1
    %p214 = por %p212, %p213
    %p216 = scmp.ne.s32.totalorder %s201, %s215
    %p217 = scmp.eq.s32.totalorder %s23, 0
    %p218 = por %p216, %p217
    %s220 = sadd.s32 %s219, 1
    %p223 = scmp.eq.s32.totalorder %s17, 1
    %p224 = scmp.ne.s32.totalorder %s219, %s221
    %p225 = scmp.eq.s32.totalorder %s17, 0
    %p226 = por %p224, %p225
    %p227 = scmp.ne.s32.totalorder %s219, %s221
    %p228 = scmp.eq.s32.totalorder %s22, 1
    %p229 = por %p227, %p228
    %p230 = scmp.ne.s32.totalorder %s221, %s222
    %p231 = scmp.eq.s32.totalorder %s22, 0
    %p232 = por %p230, %p231
    %p233 = scmp.ne.s32.totalorder %s221, %s222
    %p234 = scmp.eq.s32.totalorder %s23, 1
    %p235 = por %p233, %p234
    %p237 = scmp.ne.s32.totalorder %s222, %s236
    %p238 = scmp.eq.s32.totalorder %s23, 0
    %p239 = por %p237, %p238
    %s241 = sadd.s32 %s240, 1
    %p244 = scmp.eq.s32.totalorder %s17, 1
    %p245 = scmp.ne.s32.totalorder %s240, %s242
    %p246 = scmp.eq.s32.totalorder %s17, 0
    %p247 = por %p245, %p246
    %p248 = scmp.ne.s32.totalorder %s240, %s242
    %p249 = scmp.eq.s32.totalorder %s22, 1
    %p250 = por %p248, %p249
    %p251 = scmp.ne.s32.totalorder %s242, %s243
    %p252 = scmp.eq.s32.totalorder %s22, 0
    %p253 = por %p251, %p252
    %p254 = scmp.ne.s32.totalorder %s242, %s243
    %p255 = scmp.eq.s32.totalorder %s23, 1
    %p256 = por %p254, %p255
    %p258 = scmp.ne.s32.totalorder %s243, %s257
    %p259 = scmp.eq.s32.totalorder %s23, 0
    %p260 = por %p258, %p259
    %s261 = ssub.s32 %s17, %s24
    %p262 = scmp.eq.s32.totalorder %s261, 0
    %s264 = sadd.s32 %s263, 1
    %s265 = scalar_select %p262, %s263, %s264
    %p268 = pneg %p262
    %p269 = scmp.eq.s32.totalorder %s17, 1
    %p270 = por %p268, %p269
    %p271 = scmp.ne.s32.totalorder %s263, %s266
    %p272 = scmp.eq.s32.totalorder %s17, 0
    %p273 = por %p271, %p272
    %p274 = scmp.ne.s32.totalorder %s263, %s266
    %p275 = scmp.eq.s32.totalorder %s22, 1
    %p276 = por %p274, %p275
    %p277 = scmp.ne.s32.totalorder %s266, %s267
    %p278 = scmp.eq.s32.totalorder %s22, 0
    %p279 = por %p277, %p278
    %p280 = scmp.ne.s32.totalorder %s266, %s267
    %p281 = scmp.eq.s32.totalorder %s23, 1
    %p282 = por %p280, %p281
    %p284 = scmp.ne.s32.totalorder %s267, %s283
    %p285 = scmp.eq.s32.totalorder %s23, 0
    %p286 = por %p284, %p285
    %p287 = scmp.le.s32.totalorder 1, %s17
    %p288 = scmp.lt.s32.totalorder %s17, 3
    %p289 = pnand %p287, %p288
    %p290 = pneg %p289
    // Predicated region
    $region9: #{tpu_custom_call.1} parent=5 // pred_check
      _
    $region10: #{tpu_custom_call.1} parent=5 // pred_check_branch
      %292 = sbr.rel (%p289) target = $region12
    $region11: #{tpu_custom_call.1} parent=5 // pred_region
      %s293 = ssub.s32 %s17, 1
      // Predicated region
      $region13: #{tpu_custom_call.1} parent=11 // pred_check
        %p294 = pneg %p64
      $region14: #{tpu_custom_call.1} parent=11 // pred_check_branch
        %296 = sbr.rel (%p294) target = $region16
      $region15: #{tpu_custom_call.1} parent=11 // pred_region
        _
      $region16: #{tpu_custom_call.1} parent=11 // pred_fallthru
        _
      // Predicated region
      $region17: #{tpu_custom_call.1} parent=11 // pred_check
        %p297 = pneg %p85
      $region18: #{tpu_custom_call.1} parent=11 // pred_check_branch
        %299 = sbr.rel (%p297) target = $region20
      $region19: #{tpu_custom_call.1} parent=11 // pred_region
        _
      $region20: #{tpu_custom_call.1} parent=11 // pred_fallthru
        _
      // Predicated region
      $region21: #{tpu_custom_call.1} parent=11 // pred_check
        %p300 = pneg %p106
      $region22: #{tpu_custom_call.1} parent=11 // pred_check_branch
        %302 = sbr.rel (%p300) target = $region24
      $region23: #{tpu_custom_call.1} parent=11 // pred_region
        _
      $region24: #{tpu_custom_call.1} parent=11 // pred_fallthru
        _
      // Predicated region
      $region25: #{tpu_custom_call.1} parent=11 // pred_check
        %p303 = pneg %p127
      $region26: #{tpu_custom_call.1} parent=11 // pred_check_branch
        %305 = sbr.rel (%p303) target = $region28
      $region27: #{tpu_custom_call.1} parent=11 // pred_region
        _
      $region28: #{tpu_custom_call.1} parent=11 // pred_fallthru
        _
      // Predicated region
      $region29: #{tpu_custom_call.1} parent=11 // pred_check
        %p306 = pneg %p148
      $region30: #{tpu_custom_call.1} parent=11 // pred_check_branch
        %308 = sbr.rel (%p306) target = $region32
      $region31: #{tpu_custom_call.1} parent=11 // pred_region
        _
      $region32: #{tpu_custom_call.1} parent=11 // pred_fallthru
        _
      // Predicated region
      $region33: #{tpu_custom_call.1} parent=11 // pred_check
        %p309 = pneg %p169
      $region34: #{tpu_custom_call.1} parent=11 // pred_check_branch
        %311 = sbr.rel (%p309) target = $region36
      $region35: #{tpu_custom_call.1} parent=11 // pred_region
        _
      $region36: #{tpu_custom_call.1} parent=11 // pred_fallthru
        _
      // Predicated region
      $region37: #{tpu_custom_call.1} parent=11 // pred_check
        %p312 = pneg %p190
      $region38: #{tpu_custom_call.1} parent=11 // pred_check_branch
        %314 = sbr.rel (%p312) target = $region40
      $region39: #{tpu_custom_call.1} parent=11 // pred_region
        _
      $region40: #{tpu_custom_call.1} parent=11 // pred_fallthru
        _
      // Predicated region
      $region41: #{tpu_custom_call.1} parent=11 // pred_check
        %p315 = pneg %p211
      $region42: #{tpu_custom_call.1} parent=11 // pred_check_branch
        %317 = sbr.rel (%p315) target = $region44
      $region43: #{tpu_custom_call.1} parent=11 // pred_region
        _
      $region44: #{tpu_custom_call.1} parent=11 // pred_fallthru
        _
      // Predicated region
      $region45: #{tpu_custom_call.1} parent=11 // pred_check
        %p318 = pneg %p232
      $region46: #{tpu_custom_call.1} parent=11 // pred_check_branch
        %320 = sbr.rel (%p318) target = $region48
      $region47: #{tpu_custom_call.1} parent=11 // pred_region
        _
      $region48: #{tpu_custom_call.1} parent=11 // pred_fallthru
        _
      // Predicated region
      $region49: #{tpu_custom_call.1} parent=11 // pred_check
        %p321 = pneg %p253
      $region50: #{tpu_custom_call.1} parent=11 // pred_check_branch
        %323 = sbr.rel (%p321) target = $region52
      $region51: #{tpu_custom_call.1} parent=11 // pred_region
        _
      $region52: #{tpu_custom_call.1} parent=11 // pred_fallthru
        _
    $region12: #{tpu_custom_call.1} parent=5 // pred_fallthru
      _
    %p324 = scmp.lt.s32.totalorder %s17, 2
    // Predicated region
    $region53: #{tpu_custom_call.1} parent=5 // pred_check
      %p325 = pneg %p324
    $region54: #{tpu_custom_call.1} parent=5 // pred_check_branch
      %327 = sbr.rel (%p325) target = $region56
    $region55: #{tpu_custom_call.1} parent=5 // pred_region
      // Predicated region
      $region57: #{tpu_custom_call.1} parent=55 // pred_check
        %p328 = pneg %p37
      $region58: #{tpu_custom_call.1} parent=55 // pred_check_branch
        %330 = sbr.rel (%p328) target = $region60
      $region59: #{tpu_custom_call.1} parent=55 // pred_region
        %p331 = scmp.lt.s32.totalorder %s17, 1
        %s332 = scalar_select %p331, %s17, 1
        %s333 = smul.addr %s332, 8
        %s334 = scalar_lea.vmem %s0, %s333
      $region60: #{tpu_custom_call.1} parent=55 // pred_fallthru
        _
    $region56: #{tpu_custom_call.1} parent=5 // pred_fallthru
      _
    %p335 = scmp.le.s32.totalorder 1, %s17
    %p336 = scmp.lt.s32.totalorder %s17, 3
    %p337 = pnand %p335, %p336
    %p338 = pneg %p337
    // Predicated region
    $region61: #{tpu_custom_call.1} parent=5 // pred_check
      _
    $region62: #{tpu_custom_call.1} parent=5 // pred_check_branch
      %340 = sbr.rel (%p337) target = $region64
    $region63: #{tpu_custom_call.1} parent=5 // pred_region
      %s341 = ssub.s32 %s17, 1
      %p342 = scmp.lt.s32.totalorder %s22, 1
      %s343 = scalar_select %p342, %s22, 1
      %s344 = smul.addr %s343, 8
      %s345 = scalar_lea.vmem %s0, %s344
      %p346 = pneg %p43
      %p347 = pneg %p40
      %p348 = pneg %p64
      %p349 = pneg %p61
      %p350 = pneg %p85
      %p351 = pneg %p82
      %p352 = pneg %p106
      %p353 = pneg %p103
      %p354 = pneg %p127
      %p355 = pneg %p124
      %p356 = pneg %p148
      %p357 = pneg %p145
      %p358 = pneg %p169
      %p359 = pneg %p166
      %p360 = pneg %p190
      %p361 = pneg %p187
      %p362 = pneg %p211
      %p363 = pneg %p208
      %p364 = pneg %p232
      %p365 = pneg %p229
      %p366 = pneg %p253
      %p367 = pneg %p250
      %p368 = pneg %p279
      %p369 = pneg %p276
      %p370 = scmp.lt.s32.totalorder %s22, 1
      %s371 = scalar_select %p370, %s22, 1
      %s372 = smul.addr %s371, 8
      %s373 = scalar_lea.vmem %s11, %s372
      %p374 = scmp.lt.s32.totalorder %s22, 1
      %s375 = scalar_select %p374, %s22, 1
      %s376 = smul.addr %s375, 8
      %s377 = scalar_lea.vmem %s0, %s376
      %p378 = scmp.lt.s32.totalorder %s22, 1
      %s379 = scalar_select %p378, %s22, 1
      %s380 = smul.addr %s379, 8
      %s381 = scalar_lea.vmem %s11, %s380
      %v382 = vld [vmem:[%s377] sm:$0xff]
      %v383 = vld [vmem:[%s1] sm:$0xff]
      %v384 = vld [vmem:[%s1 + $0x8] sm:$0xff]
      %v385 = vld [vmem:[%s1 + $0x10] sm:$0xff]
      %v386 = vld [vmem:[%s1 + $0x18] sm:$0xff]
      %v387 = vld [vmem:[%s2] sm:$0x1]
      %v389 = vlaneseq
      %v390 = vshrl.u32 %v389, 7
      %v391 = vsub.s32 0, %v390
      %v392 = vrot.slane %v387, %v391
      %vm394 = vcmask 261120
      %v396 = vsel %vm394, %v382, 0
      %398 = vmatprep.subr.mxu0 0.0
      %399 = vmatpush1.msra.mxu0 %v383
      %400 = vmatprep.subr.mxu0 0.0
      %401 = vmatpush1.msra.mxu0 %v384
      %402 = vmatprep.subr.mxu0 0.0
      %403 = vmatpush1.msra.mxu0 %v385
      %404 = vmatprep.subr.mxu0 0.0
      %405 = vmatpush1.msra.mxu0 %v386
      %406 = vmatprep.subr.mxu0 0.0
      %407 = vmatpush1.msra.mxu0 0.0
      %408 = vmatprep.subr.mxu0 0.0
      %409 = vmatpush1.msra.mxu0 0.0
      %410 = vmatprep.subr.mxu0 0.0
      %411 = vmatpush1.msra.mxu0 0.0
      %412 = vmatprep.subr.mxu0 0.0
      %413 = vmatpush1.msra.mxu0 0.0
      %414 = vmatprep.subr.mxu0 0.0
      %415 = vmatpush1.msra.mxu0 0.0
      %416 = vmatprep.subr.mxu0 0.0
      %417 = vmatpush1.msra.mxu0 0.0
      %418 = vmatprep.subr.mxu0 0.0
      %419 = vmatpush1.msra.mxu0 0.0
      %420 = vmatprep.subr.mxu0 0.0
      %421 = vmatpush1.msra.mxu0 0.0
      %422 = vmatprep.subr.mxu0 0.0
      %423 = vmatpush1.msra.mxu0 0.0
      %424 = vmatprep.subr.mxu0 0.0
      %425 = vmatpush1.msra.mxu0 0.0
      %426 = vmatprep.subr.mxu0 0.0
      %427 = vmatpush1.msra.mxu0 0.0
      %428 = vmatprep.subr.mxu0 0.0
      %429 = vmatpush1.msra.mxu0 0.0
      %430 = vmatprep.subr.mxu0 0.0
      %431 = vmatpush1.msra.mxu0 0.0
      %432 = vmatprep.subr.mxu0 0.0
      %433 = vmatpush1.msra.mxu0 0.0
      %434 = vmatprep.subr.mxu0 0.0
      %435 = vmatpush1.msra.mxu0 0.0
      %436 = vmatprep.subr.mxu0 0.0
      %437 = vmatpush1.msra.mxu0 0.0
      %438 = vmatprep.subr.mxu0 0.0
      %439 = vmatpush1.msra.mxu0 0.0
      %440 = vmatprep.subr.mxu0 0.0
      %441 = vmatpush1.msra.mxu0 0.0
      %442 = vmatprep.subr.mxu0 0.0
      %443 = vmatpush1.msra.mxu0 0.0
      %444 = vmatprep.subr.mxu0 0.0
      %445 = vmatpush1.msra.mxu0 0.0
      %446 = vmatprep.subr.mxu0 0.0
      %447 = vmatpush1.msra.mxu0 0.0
      %448 = vmatprep.subr.mxu0 0.0
      %449 = vmatpush1.msra.mxu0 0.0
      %450 = vmatprep.subr.mxu0 0.0
      %451 = vmatpush1.msra.mxu0 0.0
      %452 = vmatprep.subr.mxu0 0.0
      %453 = vmatpush1.msra.mxu0 0.0
      %454 = vmatprep.subr.mxu0 0.0
      %455 = vmatpush1.msra.mxu0 0.0
      %456 = vmatprep.subr.mxu0 0.0
      %457 = vmatpush1.msra.mxu0 0.0
      %458 = vmatprep.subr.mxu0 0.0
      %459 = vmatpush1.msra.mxu0 0.0
      %460 = vmatprep.subr.mxu0 0.0
      %461 = vmatpush1.msra.mxu0 0.0
      %462 = vmatprep.mubr.f32.mxu0 0.0
      %463 = vmatmul.mubr.f32.gmra.mrb[0].mxu0 %v396
      %v464 = vpop.f32.mrb[0].mxu0
      %v465 = vadd.f32 %v392, %v464
      %v466 = vpop.f32.mrb[0].mxu0
      %467 = vdwg.mxu0
      %v468 = vmax.f32 %v465, 0.0
      %v469 = vld [vmem:[%s3] sm:$0xff]
      %v470 = vld [vmem:[%s3 + $0x8] sm:$0xff]
      %v471 = vld [vmem:[%s3 + $0x10] sm:$0xff]
      %v472 = vld [vmem:[%s3 + $0x18] sm:$0xff]
      %v473 = vld [vmem:[%s4] sm:$0x1]
      %v475 = vlaneseq
      %v476 = vshrl.u32 %v475, 7
      %v477 = vsub.s32 0, %v476
      %v478 = vrot.slane %v473, %v477
      %v481 = vsel %vm394, %v468, 0
      %483 = vmatprep.subr.mxu0 0.0
      %484 = vmatpush1.msra.mxu0 %v469
      %485 = vmatprep.subr.mxu0 0.0
      %486 = vmatpush1.msra.mxu0 %v470
      %487 = vmatprep.subr.mxu0 0.0
      %488 = vmatpush1.msra.mxu0 %v471
      %489 = vmatprep.subr.mxu0 0.0
      %490 = vmatpush1.msra.mxu0 %v472
      %491 = vmatprep.subr.mxu0 0.0
      %492 = vmatpush1.msra.mxu0 0.0
      %493 = vmatprep.subr.mxu0 0.0
      %494 = vmatpush1.msra.mxu0 0.0
      %495 = vmatprep.subr.mxu0 0.0
      %496 = vmatpush1.msra.mxu0 0.0
      %497 = vmatprep.subr.mxu0 0.0
      %498 = vmatpush1.msra.mxu0 0.0
      %499 = vmatprep.subr.mxu0 0.0
      %500 = vmatpush1.msra.mxu0 0.0
      %501 = vmatprep.subr.mxu0 0.0
      %502 = vmatpush1.msra.mxu0 0.0
      %503 = vmatprep.subr.mxu0 0.0
      %504 = vmatpush1.msra.mxu0 0.0
      %505 = vmatprep.subr.mxu0 0.0
      %506 = vmatpush1.msra.mxu0 0.0
      %507 = vmatprep.subr.mxu0 0.0
      %508 = vmatpush1.msra.mxu0 0.0
      %509 = vmatprep.subr.mxu0 0.0
      %510 = vmatpush1.msra.mxu0 0.0
      %511 = vmatprep.subr.mxu0 0.0
      %512 = vmatpush1.msra.mxu0 0.0
      %513 = vmatprep.subr.mxu0 0.0
      %514 = vmatpush1.msra.mxu0 0.0
      %515 = vmatprep.subr.mxu0 0.0
      %516 = vmatpush1.msra.mxu0 0.0
      %517 = vmatprep.subr.mxu0 0.0
      %518 = vmatpush1.msra.mxu0 0.0
      %519 = vmatprep.subr.mxu0 0.0
      %520 = vmatpush1.msra.mxu0 0.0
      %521 = vmatprep.subr.mxu0 0.0
      %522 = vmatpush1.msra.mxu0 0.0
      %523 = vmatprep.subr.mxu0 0.0
      %524 = vmatpush1.msra.mxu0 0.0
      %525 = vmatprep.subr.mxu0 0.0
      %526 = vmatpush1.msra.mxu0 0.0
      %527 = vmatprep.subr.mxu0 0.0
      %528 = vmatpush1.msra.mxu0 0.0
      %529 = vmatprep.subr.mxu0 0.0
      %530 = vmatpush1.msra.mxu0 0.0
      %531 = vmatprep.subr.mxu0 0.0
      %532 = vmatpush1.msra.mxu0 0.0
      %533 = vmatprep.subr.mxu0 0.0
      %534 = vmatpush1.msra.mxu0 0.0
      %535 = vmatprep.subr.mxu0 0.0
      %536 = vmatpush1.msra.mxu0 0.0
      %537 = vmatprep.subr.mxu0 0.0
      %538 = vmatpush1.msra.mxu0 0.0
      %539 = vmatprep.subr.mxu0 0.0
      %540 = vmatpush1.msra.mxu0 0.0
      %541 = vmatprep.subr.mxu0 0.0
      %542 = vmatpush1.msra.mxu0 0.0
      %543 = vmatprep.subr.mxu0 0.0
      %544 = vmatpush1.msra.mxu0 0.0
      %545 = vmatprep.subr.mxu0 0.0
      %546 = vmatpush1.msra.mxu0 0.0
      %547 = vmatprep.mubr.f32.mxu0 0.0
      %548 = vmatmul.mubr.f32.gmra.mrb[0].mxu0 %v481
      %v549 = vpop.f32.mrb[0].mxu0
      %v550 = vadd.f32 %v478, %v549
      %v551 = vpop.f32.mrb[0].mxu0
      %552 = vdwg.mxu0
      %v553 = vmax.f32 %v550, 0.0
      %v554 = vld [vmem:[%s5] sm:$0xff]
      %v555 = vld [vmem:[%s5 + $0x8] sm:$0xff]
      %v556 = vld [vmem:[%s6] sm:$0x1]
      %v558 = vlaneseq
      %v559 = vshrl.u32 %v558, 7
      %v560 = vsub.s32 0, %v559
      %v561 = vrot.slane %v556, %v560
      %vm563 = vcmask 130048
      %v565 = vsel %vm563, %v553, 0
      %567 = vmatprep.subr.mxu0 0.0
      %568 = vmatpush1.msra.mxu0 %v554
      %569 = vmatprep.subr.mxu0 0.0
      %570 = vmatpush1.msra.mxu0 %v555
      %571 = vmatprep.subr.mxu0 0.0
      %572 = vmatpush1.msra.mxu0 0.0
      %573 = vmatprep.subr.mxu0 0.0
      %574 = vmatpush1.msra.mxu0 0.0
      %575 = vmatprep.subr.mxu0 0.0
      %576 = vmatpush1.msra.mxu0 0.0
      %577 = vmatprep.subr.mxu0 0.0
      %578 = vmatpush1.msra.mxu0 0.0
      %579 = vmatprep.subr.mxu0 0.0
      %580 = vmatpush1.msra.mxu0 0.0
      %581 = vmatprep.subr.mxu0 0.0
      %582 = vmatpush1.msra.mxu0 0.0
      %583 = vmatprep.subr.mxu0 0.0
      %584 = vmatpush1.msra.mxu0 0.0
      %585 = vmatprep.subr.mxu0 0.0
      %586 = vmatpush1.msra.mxu0 0.0
      %587 = vmatprep.subr.mxu0 0.0
      %588 = vmatpush1.msra.mxu0 0.0
      %589 = vmatprep.subr.mxu0 0.0
      %590 = vmatpush1.msra.mxu0 0.0
      %591 = vmatprep.subr.mxu0 0.0
      %592 = vmatpush1.msra.mxu0 0.0
      %593 = vmatprep.subr.mxu0 0.0
      %594 = vmatpush1.msra.mxu0 0.0
      %595 = vmatprep.subr.mxu0 0.0
      %596 = vmatpush1.msra.mxu0 0.0
      %597 = vmatprep.subr.mxu0 0.0
      %598 = vmatpush1.msra.mxu0 0.0
      %599 = vmatprep.subr.mxu0 0.0
      %600 = vmatpush1.msra.mxu0 0.0
      %601 = vmatprep.subr.mxu0 0.0
      %602 = vmatpush1.msra.mxu0 0.0
      %603 = vmatprep.subr.mxu0 0.0
      %604 = vmatpush1.msra.mxu0 0.0
      %605 = vmatprep.subr.mxu0 0.0
      %606 = vmatpush1.msra.mxu0 0.0
      %607 = vmatprep.subr.mxu0 0.0
      %608 = vmatpush1.msra.mxu0 0.0
      %609 = vmatprep.subr.mxu0 0.0
      %610 = vmatpush1.msra.mxu0 0.0
      %611 = vmatprep.subr.mxu0 0.0
      %612 = vmatpush1.msra.mxu0 0.0
      %613 = vmatprep.subr.mxu0 0.0
      %614 = vmatpush1.msra.mxu0 0.0
      %615 = vmatprep.subr.mxu0 0.0
      %616 = vmatpush1.msra.mxu0 0.0
      %617 = vmatprep.subr.mxu0 0.0
      %618 = vmatpush1.msra.mxu0 0.0
      %619 = vmatprep.subr.mxu0 0.0
      %620 = vmatpush1.msra.mxu0 0.0
      %621 = vmatprep.subr.mxu0 0.0
      %622 = vmatpush1.msra.mxu0 0.0
      %623 = vmatprep.subr.mxu0 0.0
      %624 = vmatpush1.msra.mxu0 0.0
      %625 = vmatprep.subr.mxu0 0.0
      %626 = vmatpush1.msra.mxu0 0.0
      %627 = vmatprep.subr.mxu0 0.0
      %628 = vmatpush1.msra.mxu0 0.0
      %629 = vmatprep.subr.mxu0 0.0
      %630 = vmatpush1.msra.mxu0 0.0
      %631 = vmatprep.mubr.f32.mxu0 0.0
      %632 = vmatmul.mubr.f32.gmra.mrb[0].mxu0 %v565
      %v633 = vpop.f32.mrb[0].mxu0
      %v634 = vadd.f32 %v561, %v633
      %v635 = vpop.f32.mrb[0].mxu0
      %636 = vdwg.mxu0
      %v637 = vmax.f32 %v634, 0.0
      %v638 = vld [vmem:[%s7] sm:$0xff]
      %v639 = vld [vmem:[%s8] sm:$0x1]
      %v641 = vlaneseq
      %v642 = vshrl.u32 %v641, 7
      %v643 = vsub.s32 0, %v642
      %v644 = vrot.slane %v639, %v643
      %vm646 = vcmask 64512
      %v648 = vsel %vm646, %v637, 0
      %650 = vmatprep.subr.mxu0 0.0
      %651 = vmatpush1.msra.mxu0 %v638
      %652 = vmatprep.subr.mxu0 0.0
      %653 = vmatpush1.msra.mxu0 0.0
      %654 = vmatprep.subr.mxu0 0.0
      %655 = vmatpush1.msra.mxu0 0.0
      %656 = vmatprep.subr.mxu0 0.0
      %657 = vmatpush1.msra.mxu0 0.0
      %658 = vmatprep.subr.mxu0 0.0
      %659 = vmatpush1.msra.mxu0 0.0
      %660 = vmatprep.subr.mxu0 0.0
      %661 = vmatpush1.msra.mxu0 0.0
      %662 = vmatprep.subr.mxu0 0.0
      %663 = vmatpush1.msra.mxu0 0.0
      %664 = vmatprep.subr.mxu0 0.0
      %665 = vmatpush1.msra.mxu0 0.0
      %666 = vmatprep.subr.mxu0 0.0
      %667 = vmatpush1.msra.mxu0 0.0
      %668 = vmatprep.subr.mxu0 0.0
      %669 = vmatpush1.msra.mxu0 0.0
      %670 = vmatprep.subr.mxu0 0.0
      %671 = vmatpush1.msra.mxu0 0.0
      %672 = vmatprep.subr.mxu0 0.0
      %673 = vmatpush1.msra.mxu0 0.0
      %674 = vmatprep.subr.mxu0 0.0
      %675 = vmatpush1.msra.mxu0 0.0
      %676 = vmatprep.subr.mxu0 0.0
      %677 = vmatpush1.msra.mxu0 0.0
      %678 = vmatprep.subr.mxu0 0.0
      %679 = vmatpush1.msra.mxu0 0.0
      %680 = vmatprep.subr.mxu0 0.0
      %681 = vmatpush1.msra.mxu0 0.0
      %682 = vmatprep.subr.mxu0 0.0
      %683 = vmatpush1.msra.mxu0 0.0
      %684 = vmatprep.subr.mxu0 0.0
      %685 = vmatpush1.msra.mxu0 0.0
      %686 = vmatprep.subr.mxu0 0.0
      %687 = vmatpush1.msra.mxu0 0.0
      %688 = vmatprep.subr.mxu0 0.0
      %689 = vmatpush1.msra.mxu0 0.0
      %690 = vmatprep.subr.mxu0 0.0
      %691 = vmatpush1.msra.mxu0 0.0
      %692 = vmatprep.subr.mxu0 0.0
      %693 = vmatpush1.msra.mxu0 0.0
      %694 = vmatprep.subr.mxu0 0.0
      %695 = vmatpush1.msra.mxu0 0.0
      %696 = vmatprep.subr.mxu0 0.0
      %697 = vmatpush1.msra.mxu0 0.0
      %698 = vmatprep.subr.mxu0 0.0
      %699 = vmatpush1.msra.mxu0 0.0
      %700 = vmatprep.subr.mxu0 0.0
      %701 = vmatpush1.msra.mxu0 0.0
      %702 = vmatprep.subr.mxu0 0.0
      %703 = vmatpush1.msra.mxu0 0.0
      %704 = vmatprep.subr.mxu0 0.0
      %705 = vmatpush1.msra.mxu0 0.0
      %706 = vmatprep.subr.mxu0 0.0
      %707 = vmatpush1.msra.mxu0 0.0
      %708 = vmatprep.subr.mxu0 0.0
      %709 = vmatpush1.msra.mxu0 0.0
      %710 = vmatprep.subr.mxu0 0.0
      %711 = vmatpush1.msra.mxu0 0.0
      %712 = vmatprep.subr.mxu0 0.0
      %713 = vmatpush1.msra.mxu0 0.0
      %714 = vmatprep.mubr.f32.mxu0 0.0
      %715 = vmatmul.mubr.f32.gmra.mrb[0].mxu0 %v648
      %v716 = vpop.f32.mrb[0].mxu0
      %v717 = vadd.f32 %v644, %v716
      %v718 = vpop.f32.mrb[0].mxu0
      %719 = vdwg.mxu0
      %v720 = vmax.f32 %v717, 0.0
      %v721 = vld [vmem:[%s9] sm:$0xff]
      %v722 = vld [vmem:[%s9 + $0x8] sm:$0xff]
      %v723 = vld [vmem:[%s10] sm:$0x1]
      %v725 = vlaneseq
      %v726 = vshrl.u32 %v725, 7
      %v727 = vsub.s32 0, %v726
      %v728 = vrot.slane %v723, %v727
      %v731 = vsel %vm563, %v720, 0
      %733 = vmatprep.subr.mxu0 0.0
      %734 = vmatpush1.msra.mxu0 %v721
      %735 = vmatprep.subr.mxu0 0.0
      %736 = vmatpush1.msra.mxu0 %v722
      %737 = vmatprep.subr.mxu0 0.0
      %738 = vmatpush1.msra.mxu0 0.0
      %739 = vmatprep.subr.mxu0 0.0
      %740 = vmatpush1.msra.mxu0 0.0
      %741 = vmatprep.subr.mxu0 0.0
      %742 = vmatpush1.msra.mxu0 0.0
      %743 = vmatprep.subr.mxu0 0.0
      %744 = vmatpush1.msra.mxu0 0.0
      %745 = vmatprep.subr.mxu0 0.0
      %746 = vmatpush1.msra.mxu0 0.0
      %747 = vmatprep.subr.mxu0 0.0
      %748 = vmatpush1.msra.mxu0 0.0
      %749 = vmatprep.subr.mxu0 0.0
      %750 = vmatpush1.msra.mxu0 0.0
      %751 = vmatprep.subr.mxu0 0.0
      %752 = vmatpush1.msra.mxu0 0.0
      %753 = vmatprep.subr.mxu0 0.0
      %754 = vmatpush1.msra.mxu0 0.0
      %755 = vmatprep.subr.mxu0 0.0
      %756 = vmatpush1.msra.mxu0 0.0
      %757 = vmatprep.subr.mxu0 0.0
      %758 = vmatpush1.msra.mxu0 0.0
      %759 = vmatprep.subr.mxu0 0.0
      %760 = vmatpush1.msra.mxu0 0.0
      %761 = vmatprep.subr.mxu0 0.0
      %762 = vmatpush1.msra.mxu0 0.0
      %763 = vmatprep.subr.mxu0 0.0
      %764 = vmatpush1.msra.mxu0 0.0
      %765 = vmatprep.subr.mxu0 0.0
      %766 = vmatpush1.msra.mxu0 0.0
      %767 = vmatprep.subr.mxu0 0.0
      %768 = vmatpush1.msra.mxu0 0.0
      %769 = vmatprep.subr.mxu0 0.0
      %770 = vmatpush1.msra.mxu0 0.0
      %771 = vmatprep.subr.mxu0 0.0
      %772 = vmatpush1.msra.mxu0 0.0
      %773 = vmatprep.subr.mxu0 0.0
      %774 = vmatpush1.msra.mxu0 0.0
      %775 = vmatprep.subr.mxu0 0.0
      %776 = vmatpush1.msra.mxu0 0.0
      %777 = vmatprep.subr.mxu0 0.0
      %778 = vmatpush1.msra.mxu0 0.0
      %779 = vmatprep.subr.mxu0 0.0
      %780 = vmatpush1.msra.mxu0 0.0
      %781 = vmatprep.subr.mxu0 0.0
      %782 = vmatpush1.msra.mxu0 0.0
      %783 = vmatprep.subr.mxu0 0.0
      %784 = vmatpush1.msra.mxu0 0.0
      %785 = vmatprep.subr.mxu0 0.0
      %786 = vmatpush1.msra.mxu0 0.0
      %787 = vmatprep.subr.mxu0 0.0
      %788 = vmatpush1.msra.mxu0 0.0
      %789 = vmatprep.subr.mxu0 0.0
      %790 = vmatpush1.msra.mxu0 0.0
      %791 = vmatprep.subr.mxu0 0.0
      %792 = vmatpush1.msra.mxu0 0.0
      %793 = vmatprep.subr.mxu0 0.0
      %794 = vmatpush1.msra.mxu0 0.0
      %795 = vmatprep.subr.mxu0 0.0
      %796 = vmatpush1.msra.mxu0 0.0
      %797 = vmatprep.mubr.f32.mxu0 0.0
      %798 = vmatmul.mubr.f32.gmra.mrb[0].mxu0 %v731
      %v799 = vpop.f32.mrb[0].mxu0
      %v800 = vadd.f32 %v728, %v799
      %v801 = vpop.f32.mrb[0].mxu0
      %802 = vdwg.mxu0
      %vm803 = vcmask 31744
      %804 = vst.msk [vmem:[%s381] sm:$0xff] %vm803, %v800
      %p805 = scmp.lt.s32.totalorder %s22, 1
      %s806 = scalar_select %p805, %s22, 1
      %s807 = smul.addr %s806, 8
      %s808 = scalar_lea.vmem %s11, %s807
      // Predicated region
      $region65: #{tpu_custom_call.1} parent=63 // pred_check
        %p809 = pneg %p276
      $region66: #{tpu_custom_call.1} parent=63 // pred_check_branch
        %811 = sbr.rel (%p809) target = $region68
      $region67: #{tpu_custom_call.1} parent=63 // pred_region
        _
      $region68: #{tpu_custom_call.1} parent=63 // pred_fallthru
        _
    $region64: #{tpu_custom_call.1} parent=5 // pred_fallthru
      _
    %p812 = scmp.le.s32.totalorder 2, %s17
    // Predicated region
    $region69: #{tpu_custom_call.1} parent=5 // pred_check
      %p813 = pneg %p812
    $region70: #{tpu_custom_call.1} parent=5 // pred_check_branch
      %815 = sbr.rel (%p813) target = $region72
    $region71: #{tpu_custom_call.1} parent=5 // pred_region
      %s816 = ssub.s32 %s17, 2
      // Predicated region
      $region73: #{tpu_custom_call.1} parent=71 // pred_check
        %p817 = pneg %p282
      $region74: #{tpu_custom_call.1} parent=71 // pred_check_branch
        %819 = sbr.rel (%p817) target = $region76
      $region75: #{tpu_custom_call.1} parent=71 // pred_region
        %p820 = scmp.lt.s32.totalorder %s23, 1
        %s821 = scalar_select %p820, %s23, 1
        %s822 = smul.addr %s821, 8
        %s823 = scalar_lea.vmem %s11, %s822
      $region76: #{tpu_custom_call.1} parent=71 // pred_fallthru
        _
    $region72: #{tpu_custom_call.1} parent=5 // pred_fallthru
      _
  $region6: #{tpu_custom_call.1} parent=0 // loop_footer
    %s21 = sadd.s32 1, %s17
  $region7: #{tpu_custom_call.1} parent=0 // loop_footer_branch
    %16 = sbr.rel target = $region3
  $region8: #{tpu_custom_call.1} parent=0 // loop_exit
    _

</llo_original>
